<compile_context>
chip_gen: v7x
topology: tpu7x:2x2x1
jax: 0.10.0
libtpu: 0.0.40
codegen_flags: <defaults>
</compile_context>

<pallas_src>
import math
import numpy as np
import jax
import jax.numpy as jnp
from jax import lax
from jax.experimental import pallas as pl
from jax.experimental.pallas import tpu as pltpu

# ---------------- configuration (mirrors the PCNN.__init__ arguments) ----------------
INPUTS_D = [1, 3, 4, 5, 6, 7]        # features feeding the "D" (neural) branch
CASE_COL = [0]
TEMP_COL = [1]
POWER_COL = [2]
OUT_COL = 3
NEIGH_COL = [4]
INPUT_NN_HIDDEN = [32]               # one Linear+ReLU preprocessing layer
LSTM_HIDDEN = 32
LSTM_LAYERS = 2
OUTPUT_NN_HIDDEN = [32]              # output NN: Linear+Tanh, Linear+Tanh -> 1
LEARN_INITIAL_HIDDEN = True
LAYER_NORM = True

ZERO_POWER = 0.1                     # scaled "no power" value (len(power_column) == 1)
DIVISION_FACTOR = 10.0
ROOM_MIN, ROOM_DIFF = 10.0, 20.0
NEIGH_MIN, NEIGH_DIFF = 10.0, 20.0
OUT_MIN, OUT_DIFF = -10.0, 40.0
A_SCALING, B_SCALING, C_SCALING, D_SCALING = 60.0, 300.0, 300.0, 60.0
LN_EPS = 1e-5

H = LSTM_HIDDEN
assert INPUT_NN_HIDDEN[-1] == LSTM_HIDDEN == OUTPUT_NN_HIDDEN[0]

# ---- packed per-sample input layout (one operand instead of seven) ----
NF = 16                  # lanes 0..5: INPUTS_D features, 6..7: zero pad
LANE_TEMP = 8
LANE_OUT = 9
LANE_NEIGH = 10
LANE_POWER = 11
LANE_CASE = 12
LANE_LASTE = 13
LANE_ONE = 14            # constant 1.0 lane: carries every folded bias through the MXU

# ---- packed resident parameter slab: rows of a (W_MIX_ROWS, H) VMEM tile ----
ROW_WIN = 0              # rows   0:16  input-NN weight (b_in folded into row LANE_ONE)
ROW_WPHYS = 16           # rows  16:32  physics-fold weight (cols 0..4 used)
ROW_WOUT0 = 32           # rows  32:64  first output-NN weight with LayerNorm affine folded
ROW_WOUT1 = 64           # rows  64:96  last output-NN weight (column 0 only)
ROW_BOUT0 = 96           # folded first output-NN bias
ROW_C0 = 97              # rows 97, 98: learned initial cell state per LSTM layer
ROW_BOUT1 = 99           # scalar at lane 0
W_MIX_ROWS = 104

NOUT = 2 * LSTM_LAYERS * H + 8       # [h0 | h1 | c0 | c1 | out | D | E | pad]
TILE_B_MAX = 4096                    # max batch tile (multiple of 8); ~5 MiB of I/O tiles


# ---------------- Pallas kernel ----------------
def pcnn_kernel(xin_ref, w_lstm_ref, gbias_ref, wmix_ref, y_ref):
    f32 = jnp.float32
    xin = xin_ref[...]                                    # (TB, NF)
    tb = xin.shape[0]

    # resident parameter slab (constant index_map -> stays in VMEM across grid steps)
    w_in = wmix_ref[ROW_WIN:ROW_WIN + NF, :]              # (NF, H), bias on const-1 lane
    w_phys = wmix_ref[ROW_WPHYS:ROW_WPHYS + NF, :]        # (NF, H), physics fold
    w_out0 = wmix_ref[ROW_WOUT0:ROW_WOUT0 + H, :]         # (H, H), LayerNorm affine folded
    w_out1 = wmix_ref[ROW_WOUT1:ROW_WOUT1 + H, :]         # (H, H), only column 0 nonzero
    b_out0 = wmix_ref[ROW_BOUT0:ROW_BOUT0 + 1, :]         # (1, H)
    b_out1 = wmix_ref[ROW_BOUT1:ROW_BOUT1 + 1, 0:1]       # (1, 1)

    # --- D branch: input NN (Linear + ReLU); bias rides the constant-1 lane of xin ---
    t = jnp.maximum(jnp.dot(xin, w_in, preferred_element_type=f32), 0.0)

    # --- physics / energy-accumulator branch folded into ONE small MXU matmul:
    #     cols = [E_lin, D_base(=x_temp), power, power*a, power*d] ---
    phys = jnp.dot(xin, w_phys, preferred_element_type=f32)

    # --- 2-layer LSTM cell (seq == 1, batch_first). Gate lanes are pre-permuted to
    #     (i, f, o, g); the constant h0 @ Whh^T + b_ih + b_hh term is folded into gbias
    #     (states=None path) and the i/f/o columns are pre-scaled by 0.5 so the sigmoid
    #     is a single tanh EUP op per gate block. ---
    h_new, c_new = [], []
    for l in range(LSTM_LAYERS):
        gates = jnp.dot(t, w_lstm_ref[l], preferred_element_type=f32) + gbias_ref[l]
        sig = 0.5 * jnp.tanh(gates[:, 0:3 * H]) + 0.5     # sigmoid of the unscaled gates
        g_g = jnp.tanh(gates[:, 3 * H:4 * H])
        i_g, f_g, o_g = sig[:, 0:H], sig[:, H:2 * H], sig[:, 2 * H:3 * H]
        c0 = wmix_ref[ROW_C0 + l:ROW_C0 + l + 1, :]       # (1, H) learned initial cell
        c = f_g * c0 + i_g * g_g
        h = o_g * jnp.tanh(c)
        h_new.append(h)
        c_new.append(c)
        t = h

    # --- LayerNorm: only mean / rsqrt in-kernel; affine folded into w_out0 / b_out0 ---
    if LAYER_NORM:
        mu = jnp.mean(t, axis=1, keepdims=True)
        var = jnp.mean((t - mu) ** 2, axis=1, keepdims=True)
        t = (t - mu) * lax.rsqrt(var + LN_EPS)

    # --- output NN: Linear + Tanh, Linear + Tanh; last layer as an MXU matmul ---
    t = jnp.tanh(jnp.dot(t, w_out0, preferred_element_type=f32) + b_out0)
    y1p = jnp.dot(t, w_out1, preferred_element_type=f32)          # (TB, H), col 0 meaningful
    y1 = jnp.tanh(y1p[:, 0:1] + b_out1)                           # (TB, 1)

    # --- short masked heating/cooling tail on narrow columns ---
    x_power = xin[:, LANE_POWER:LANE_POWER + 1]
    x_case = xin[:, LANE_CASE:LANE_CASE + 1]
    E_lin = phys[:, 0:1]
    d_base = phys[:, 1:2]
    power = phys[:, 2:3]                                  # x_power - ZERO_POWER
    heat_add = phys[:, 3:4]                               # power * exp(a)/a_scaling
    cool_add = phys[:, 4:5]                               # power * exp(d)/d_scaling

    # torch's data-dependent `if sum(mask) > 0:` gating is replaced by unconditional
    # masked updates (identical result); nested where keeps x_case == 0.5 in neither branch.
    mask = (x_power > 0.05) & (jnp.abs(power) > 1e-6)
    add = jnp.where(x_case > 0.5, heat_add, jnp.where(x_case < 0.5, cool_add, 0.0))
    E = jnp.where(mask, E_lin + add, E_lin)
    D = y1 * (1.0 / DIVISION_FACTOR) + d_base
    out = jnp.where(x_case < 1e-6, 0.0, D + E)

    # --- writeback: one dense 128-lane store for h/c + one 8-lane tail store ---
    y_ref[:, 0:4 * H] = jnp.concatenate(h_new + c_new, axis=1)    # (TB, 128)
    tail = jnp.concatenate(
        [out, D, E, jnp.zeros((tb, NOUT - 4 * H - 3), f32)], axis=1)
    y_ref[:, 4 * H:NOUT] = tail


# ---------------- parameter init (deterministic, mirrors _build_model init) ----------------
def init_params(key):
    def xavier(k, shape):                                 # torch.nn.init.xavier_normal_
        fan_out, fan_in = shape
        std = math.sqrt(2.0 / (fan_in + fan_out))
        return std * jax.random.normal(k, shape, jnp.float32)

    keys = jax.random.split(key, 8)
    nD = len(INPUTS_D)
    Hi = INPUT_NN_HIDDEN[0]
    Ho = OUTPUT_NN_HIDDEN[0]
    p = {}
    p["w_in"] = xavier(keys[0], (Hi, nD))
    p["b_in"] = jnp.zeros((Hi,), jnp.float32)
    p["wih"] = jnp.stack([xavier(keys[1 + l], (4 * H, Hi if l == 0 else H))
                          for l in range(LSTM_LAYERS)])
    p["whh"] = jnp.stack([xavier(keys[3 + l], (4 * H, H)) for l in range(LSTM_LAYERS)])
    p["bih"] = jnp.zeros((LSTM_LAYERS, 4 * H), jnp.float32)
    p["bhh"] = jnp.zeros((LSTM_LAYERS, 4 * H), jnp.float32)
    p["ln_g"] = jnp.ones((H,), jnp.float32)
    p["ln_b"] = jnp.zeros((H,), jnp.float32)
    p["w_out0"] = xavier(keys[5], (Ho, H))
    p["b_out0"] = jnp.zeros((Ho,), jnp.float32)
    p["w_out1"] = xavier(keys[6], (1, Ho))
    p["b_out1"] = jnp.zeros((1,), jnp.float32)
    # PositiveLinear log_weights are init'd to 0 (-> exp == 1)
    p["a_logw"] = jnp.zeros((1, len(POWER_COL)), jnp.float32)
    p["b_logw"] = jnp.zeros((1, 1), jnp.float32)
    p["c_logw"] = jnp.zeros((1, len(NEIGH_COL)), jnp.float32)
    p["d_logw"] = jnp.zeros((1, len(POWER_COL)), jnp.float32)
    p["initial_h"] = jnp.zeros((LSTM_LAYERS, H), jnp.float32)
    p["initial_c"] = jnp.zeros((LSTM_LAYERS, H), jnp.float32)
    return p


# ---------------- wrapper glue: packing, gate permutation, bias / physics folding ----------------
def _prepare(params, x_):
    f32 = jnp.float32
    x = x_.astype(f32)
    if x.ndim == 2:
        x = x[:, None, :]                                 # (B, seq=1, F), batch_first
    B = x.shape[0]

    # states=None path: last_D = last_E = 0, learned (h0, c0)
    last_D = jnp.zeros((B,), f32)
    last_E = jnp.zeros((B, 1), f32)

    xl = x[:, -1, :]
    # warm_start=False: overwrite the room-temperature column with last_D (== 0)
    xl = xl.at[:, TEMP_COL[0]].set(last_D)

    # single packed per-sample operand (lane layout documented at the top)
    xin = jnp.concatenate(
        [
            xl[:, jnp.array(INPUTS_D)],                   # lanes 0..5
            jnp.zeros((B, 2), f32),                       # lanes 6, 7
            xl[:, TEMP_COL[0]:TEMP_COL[0] + 1],           # lane 8
            xl[:, OUT_COL:OUT_COL + 1],                   # lane 9
            xl[:, NEIGH_COL[0]:NEIGH_COL[0] + 1],         # lane 10
            xl[:, POWER_COL[0]:POWER_COL[0] + 1],         # lane 11
            xl[:, CASE_COL[0]:CASE_COL[0] + 1],           # lane 12
            last_E,                                       # lane 13
            jnp.ones((B, 1), f32),                        # lane 14: constant 1 (biases)
            jnp.zeros((B, NF - 15), f32),                 # lane 15
        ],
        axis=1,
    )

    # LSTM weights: permute gates (i,f,g,o) -> (i,f,o,g), transpose to (in, 4H), fold the
    # constant h0 @ Whh^T + b_ih + b_hh contribution into one gate bias per layer, and
    # pre-scale the sigmoid (i,f,o) columns by 0.5 (kernel uses 0.5*tanh(.)+0.5).
    perm = np.concatenate([np.arange(0, H), np.arange(H, 2 * H),
                           np.arange(3 * H, 4 * H), np.arange(2 * H, 3 * H)])
    wih_r = params["wih"][:, perm, :]                     # (L, 4H, in)
    whh_r = params["whh"][:, perm, :]                     # (L, 4H, H)
    bih_r = params["bih"][:, perm]
    bhh_r = params["bhh"][:, perm]
    h0 = params["initial_h"] if LEARN_INITIAL_HIDDEN else jnp.zeros((LSTM_LAYERS, H), f32)
    c0 = params["initial_c"] if LEARN_INITIAL_HIDDEN else jnp.zeros((LSTM_LAYERS, H), f32)
    w_lstm = jnp.transpose(wih_r, (0, 2, 1))              # (L, in, 4H)
    gate_bias = (jnp.einsum("lh,lgh->lg", h0, whh_r) + bih_r + bhh_r)[:, None, :]  # (L,1,4H)
    gate_scale = jnp.concatenate([jnp.full((3 * H,), 0.5, f32), jnp.ones((H,), f32)])
    w_lstm = w_lstm * gate_scale
    gate_bias = gate_bias * gate_scale

    # PositiveLinear effective coefficients
    ea = jnp.exp(params["a_logw"][0, 0]) / A_SCALING
    eb = jnp.exp(params["b_logw"][0, 0]) / B_SCALING
    ec = jnp.exp(params["c_logw"][0, 0]) / C_SCALING
    ed = jnp.exp(params["d_logw"][0, 0]) / D_SCALING

    # unnormalization affines: v_phys = v * S + C with C = MIN - 0.1 * S
    rs = ROOM_DIFF / 0.8
    rc = ROOM_MIN - 0.1 * rs
    os_ = OUT_DIFF / 0.8
    oc = OUT_MIN - 0.1 * os_
    ns = NEIGH_DIFF / 0.8
    nc = NEIGH_MIN - 0.1 * ns

    # physics fold: cols [E_lin, D_base, power, power*ea, power*ed], bias on the const lane.
    # E_lin = last_E - eb*(room - out_t) - ec*(room - neigh_t) expanded over the input lanes.
    w_phys = jnp.zeros((NF, H), f32)
    w_phys = w_phys.at[LANE_TEMP, 0].set(-(eb + ec) * rs)
    w_phys = w_phys.at[LANE_OUT, 0].set(eb * os_)
    w_phys = w_phys.at[LANE_NEIGH, 0].set(ec * ns)
    w_phys = w_phys.at[LANE_LASTE, 0].set(1.0 - (eb + ec) * rs)
    w_phys = w_phys.at[LANE_ONE, 0].set(-eb * (rc - oc) - ec * (rc - nc))
    w_phys = w_phys.at[LANE_TEMP, 1].set(1.0)                       # D base = x_temp
    w_phys = w_phys.at[LANE_POWER, 2].set(1.0)                      # power
    w_phys = w_phys.at[LANE_ONE, 2].set(-ZERO_POWER)
    w_phys = w_phys.at[LANE_POWER, 3].set(ea)                       # heating increment
    w_phys = w_phys.at[LANE_ONE, 3].set(-ZERO_POWER * ea)
    w_phys = w_phys.at[LANE_POWER, 4].set(ed)                       # cooling increment
    w_phys = w_phys.at[LANE_ONE, 4].set(-ZERO_POWER * ed)

    # input NN weight padded to NF rows, bias folded onto the constant-1 lane row
    w_in_pad = jnp.zeros((NF, H), f32)
    w_in_pad = w_in_pad.at[0:len(INPUTS_D), :].set(params["w_in"].T)
    w_in_pad = w_in_pad.at[LANE_ONE, :].set(params["b_in"])

    # LayerNorm affine folded into the first output-NN layer
    w_out0f = params["ln_g"][:, None] * params["w_out0"].T          # (H, Ho)
    b_out0f = params["ln_b"] @ params["w_out0"].T + params["b_out0"]

    # last output-NN weight as a column so the reduction rides the MXU
    w_out1_pad = jnp.zeros((H, H), f32).at[:, 0].set(params["w_out1"][0])

    def scalar_row(v):
        return jnp.zeros((1, H), f32).at[0, 0].set(v)

    w_mix = jnp.concatenate(
        [
            w_in_pad,                                     # rows   0..15
            w_phys,                                       # rows  16..31
            w_out0f,                                      # rows  32..63
            w_out1_pad,                                   # rows  64..95
            b_out0f[None, :],                             # row   96
            c0,                                           # rows  97, 98
            scalar_row(params["b_out1"][0]),              # row   99
            jnp.zeros((W_MIX_ROWS - 100, H), f32),        # rows 100..103 pad
        ],
        axis=0,
    )
    return xin, w_lstm, gate_bias, w_mix


def _round_up(a, m):
    return ((a + m - 1) // m) * m


def _cdiv(a, b):
    return (a + b - 1) // b


def pcnn_forward(params, x_, tile_b_max=TILE_B_MAX):
    """Returns (output, D, E, h, c); output = T = D + E, (h, c) the new LSTM states."""
    f32 = jnp.float32
    xin, w_lstm, gate_bias, w_mix = _prepare(params, x_)
    B = xin.shape[0]

    # batch tiling: tile sized to the batch (bounded padding waste), guaranteeing >=2 tiles
    # (>=4 for big batches) so both v7x TensorCores are used and the DMA pipeline overlaps.
    b8 = _round_up(B, 8)
    n_min = _cdiv(b8, tile_b_max)
    if b8 >= 1024:
        n_tiles = max(n_min, 4)
    elif b8 >= 16:
        n_tiles = max(n_min, 2)
    else:
        n_tiles = max(n_min, 1)
    tile_b = _round_up(_cdiv(b8, n_tiles), 8)
    n_tiles = _cdiv(b8, tile_b)
    b_pad = n_tiles * tile_b
    if b_pad > B:
        xin = jnp.concatenate([xin, jnp.zeros((b_pad - B, NF), f32)], axis=0)

    per_row_flops = (2 * NF * H * 2                       # input NN + physics matmuls
                     + LSTM_LAYERS * 2 * H * 4 * H        # LSTM gate matmuls
                     + 2 * 2 * H * H                      # output NN matmuls
                     + 256)                               # elementwise
    cost = pl.CostEstimate(
        flops=int(b_pad * per_row_flops),
        transcendentals=int(b_pad * (LSTM_LAYERS * 3 * H + 2 * H + 2)),
        bytes_accessed=int(4 * (b_pad * (NF + NOUT)
                                + w_lstm.size + gate_bias.size + w_mix.size)),
    )

    y = pl.pallas_call(
        pcnn_kernel,
        out_shape=jax.ShapeDtypeStruct((b_pad, NOUT), f32),
        grid=(n_tiles,),
        in_specs=[
            pl.BlockSpec((tile_b, NF), lambda i: (i, 0)),                 # batch-tiled
            pl.BlockSpec((LSTM_LAYERS, H, 4 * H), lambda i: (0, 0, 0)),   # resident weights
            pl.BlockSpec((LSTM_LAYERS, 1, 4 * H), lambda i: (0, 0, 0)),
            pl.BlockSpec((W_MIX_ROWS, H), lambda i: (0, 0)),
        ],
        out_specs=pl.BlockSpec((tile_b, NOUT), lambda i: (i, 0)),         # lane-dense output
        compiler_params=pltpu.CompilerParams(
            dimension_semantics=("parallel",),      # megacore-shard batch tiles on v7x
            vmem_limit_bytes=32 * 1024 * 1024,
        ),
        cost_estimate=cost,
    )(xin, w_lstm, gate_bias, w_mix)

    h = jnp.stack([y[:B, l * H:(l + 1) * H] for l in range(LSTM_LAYERS)])
    c = jnp.stack([y[:B, (LSTM_LAYERS + l) * H:(LSTM_LAYERS + l + 1) * H]
                   for l in range(LSTM_LAYERS)])
    base = 2 * LSTM_LAYERS * H
    out = y[:B, base:base + 1]
    D = y[:B, base + 1:base + 2]
    E = y[:B, base + 2:base + 3]
    return out, D, E, h, c


# ---------------- pure-JAX reference (mirrors the torch module structure directly) ----------------
def pcnn_reference(params, x_):
    f32 = jnp.float32
    x = x_.astype(f32)
    if x.ndim == 2:
        x = x[:, None, :]
    B = x.shape[0]
    last_D = jnp.zeros((B, 1), f32)
    last_E = jnp.zeros((B, 1), f32)
    if LEARN_INITIAL_HIDDEN:
        h = [jnp.broadcast_to(params["initial_h"][l], (B, H)) for l in range(LSTM_LAYERS)]
        c = [jnp.broadcast_to(params["initial_c"][l], (B, H)) for l in range(LSTM_LAYERS)]
    else:
        h = [jnp.zeros((B, H), f32) for _ in range(LSTM_LAYERS)]
        c = [jnp.zeros((B, H), f32) for _ in range(LSTM_LAYERS)]

    x = x.at[:, -1, TEMP_COL[0]].set(last_D[:, 0])        # warm_start=False
    xl = x[:, -1, :]

    t = jax.nn.relu(xl[:, jnp.array(INPUTS_D)] @ params["w_in"].T + params["b_in"])
    hs, cs = [], []
    for l in range(LSTM_LAYERS):
        gates = (t @ params["wih"][l].T + params["bih"][l]
                 + h[l] @ params["whh"][l].T + params["bhh"][l])
        i_g = jax.nn.sigmoid(gates[:, 0:H])
        f_g = jax.nn.sigmoid(gates[:, H:2 * H])
        g_g = jnp.tanh(gates[:, 2 * H:3 * H])
        o_g = jax.nn.sigmoid(gates[:, 3 * H:4 * H])
        c_n = f_g * c[l] + i_g * g_g
        h_n = o_g * jnp.tanh(c_n)
        hs.append(h_n)
        cs.append(c_n)
        t = h_n
    if LAYER_NORM:
        mu = t.mean(axis=1, keepdims=True)
        var = ((t - mu) ** 2).mean(axis=1, keepdims=True)
        t = (t - mu) / jnp.sqrt(var + LN_EPS) * params["ln_g"] + params["ln_b"]
    t = jnp.tanh(t @ params["w_out0"].T + params["b_out0"])
    t = jnp.tanh(t @ params["w_out1"].T + params["b_out1"])

    x_temp = xl[:, TEMP_COL[0]:TEMP_COL[0] + 1]
    D = t / DIVISION_FACTOR + x_temp

    x_out = xl[:, OUT_COL:OUT_COL + 1]
    x_neigh = xl[:, NEIGH_COL[0]:NEIGH_COL[0] + 1]
    x_power = xl[:, POWER_COL[0]:POWER_COL[0] + 1]
    x_case = xl[:, CASE_COL[0]:CASE_COL[0] + 1]

    room = (x_temp + last_E - 0.1) / 0.8 * ROOM_DIFF + ROOM_MIN
    out_t = (x_out - 0.1) / 0.8 * OUT_DIFF + OUT_MIN
    neigh_t = (x_neigh - 0.1) / 0.8 * NEIGH_DIFF + NEIGH_MIN

    E = last_E
    E = E - (room - out_t) * jnp.exp(params["b_logw"][0, 0]) / B_SCALING
    E = E - (room - neigh_t) * jnp.exp(params["c_logw"][0, 0]) / C_SCALING

    eff = jnp.where(x_power > 0.05, x_power, ZERO_POWER)
    mask = jnp.abs(eff - ZERO_POWER) > 1e-6
    heating = x_case > 0.5
    cooling = x_case < 0.5
    power = x_power - ZERO_POWER
    E = jnp.where(mask & heating, E + power * jnp.exp(params["a_logw"][0, 0]) / A_SCALING, E)
    E = jnp.where(mask & cooling, E + power * jnp.exp(params["d_logw"][0, 0]) / D_SCALING, E)

    out = D + E
    out = jnp.where(x_case < 1e-6, 0.0, out)
    return out, D, E, jnp.stack(hs), jnp.stack(cs)


if __name__ == "__main__":
    key = jax.random.PRNGKey(0)
    k_x, k_p, k_x2 = jax.random.split(key, 3)
    B, F = 6, 8
    x_ = jax.random.uniform(k_x, (B, F), dtype=jnp.float32)
    # exercise heating / cooling / neither (case==0.5) / zero-case / power-mask paths
    x_ = x_.at[:, CASE_COL[0]].set(jnp.array([1.0, 0.0, 1.0, 0.3, 0.5, 0.0], jnp.float32))
    x_ = x_.at[:, POWER_COL[0]].set(jnp.array([0.6, 0.02, 0.1, 0.4, 0.7, 0.3], jnp.float32))

    params = init_params(k_p)
    # perturb the zero-initialised biases / initial states / log-weights so the folded
    # gate-bias, learned-initial-state, LayerNorm-affine and PositiveLinear folds are exercised
    perturb = ["bih", "bhh", "initial_h", "initial_c", "b_in", "b_out0", "b_out1",
               "ln_g", "ln_b", "a_logw", "b_logw", "c_logw", "d_logw"]
    for name, k in zip(perturb, jax.random.split(jax.random.PRNGKey(1), len(perturb))):
        params[name] = params[name] + 0.1 * jax.random.normal(k, params[name].shape, jnp.float32)

    fwd = jax.jit(pcnn_forward)

    outs = jax.block_until_ready(fwd(params, x_))
    refs = pcnn_reference(params, x_)
    for o, r in zip(outs, refs):
        np.testing.assert_allclose(np.asarray(o), np.asarray(r), rtol=5e-5, atol=5e-5)

    # larger, non-multiple-of-8 batch: exercises the multi-tile grid + padding path
    B2 = 300
    x2 = jax.random.uniform(k_x2, (B2, F), dtype=jnp.float32)
    outs2 = jax.block_until_ready(fwd(params, x2))
    refs2 = pcnn_reference(params, x2)
    for o, r in zip(outs2, refs2):
        np.testing.assert_allclose(np.asarray(o), np.asarray(r), rtol=5e-5, atol=5e-5)

    print("KERNEL_OK")
</pallas_src>

<mosaic_0001>
module attributes {stable_mosaic.version = 11 : i64} {
  func.func @pcnn_kernel(%arg0: i32, %arg1: memref<8x16xf32, #tpu.memory_space<vmem>>, %arg2: memref<2x32x128xf32, #tpu.memory_space<vmem>>, %arg3: memref<2x1x128xf32, #tpu.memory_space<vmem>>, %arg4: memref<104x32xf32, #tpu.memory_space<vmem>>, %arg5: memref<8x136xf32, #tpu.memory_space<vmem>>) attributes {dimension_semantics = [#tpu.dimension_semantics<parallel>], iteration_bounds = array<i64: 1>, scalar_prefetch = 0 : i64, scratch_operands = 0 : i64, tpu.core_type = #tpu.core_type<tc>, window_params = [{transform_indices = @transform_0, window_bounds = array<i64: 8, 16>}, {pipeline_mode = #tpu.pipeline_mode<synchronous>, transform_indices = @transform_1, window_bounds = array<i64: 2, 32, 128>}, {pipeline_mode = #tpu.pipeline_mode<synchronous>, transform_indices = @transform_2, window_bounds = array<i64: 2, 1, 128>}, {pipeline_mode = #tpu.pipeline_mode<synchronous>, transform_indices = @transform_3, window_bounds = array<i64: 104, 32>}, {transform_indices = @transform_4, window_bounds = array<i64: 8, 136>}]} {
    %c0 = arith.constant 0 : index
    %c0_0 = arith.constant 0 : index
    %0 = vector.load %arg1[%c0, %c0_0] : memref<8x16xf32, #tpu.memory_space<vmem>>, vector<8x16xf32>
    %c0_1 = arith.constant 0 : index
    %c0_2 = arith.constant 0 : index
    %1 = vector.load %arg4[%c0_1, %c0_2] : memref<104x32xf32, #tpu.memory_space<vmem>>, vector<16x32xf32>
    %c16 = arith.constant 16 : index
    %c0_3 = arith.constant 0 : index
    %2 = vector.load %arg4[%c16, %c0_3] : memref<104x32xf32, #tpu.memory_space<vmem>>, vector<16x32xf32>
    %c32 = arith.constant 32 : index
    %c0_4 = arith.constant 0 : index
    %3 = vector.load %arg4[%c32, %c0_4] : memref<104x32xf32, #tpu.memory_space<vmem>>, vector<32x32xf32>
    %c64 = arith.constant 64 : index
    %c0_5 = arith.constant 0 : index
    %4 = vector.load %arg4[%c64, %c0_5] : memref<104x32xf32, #tpu.memory_space<vmem>>, vector<32x32xf32>
    %c96 = arith.constant 96 : index
    %c0_6 = arith.constant 0 : index
    %5 = vector.load %arg4[%c96, %c0_6] : memref<104x32xf32, #tpu.memory_space<vmem>>, vector<1x32xf32>
    %c99 = arith.constant 99 : index
    %c0_7 = arith.constant 0 : index
    %6 = vector.load %arg4[%c99, %c0_7] : memref<104x32xf32, #tpu.memory_space<vmem>>, vector<1x1xf32>
    %cst = arith.constant dense<0.000000e+00> : vector<8x32xf32>
    %7 = tpu.matmul %0, %1, %cst {dimension_numbers = #tpu.dot_dimension_numbers<[1], [0], [0], [1], [0, 0, 1, 1], [], []>} : vector<8x16xf32>, vector<16x32xf32>, vector<8x32xf32> -> vector<8x32xf32>
    %cst_8 = arith.constant 0.000000e+00 : f32
    %8 = vector.broadcast %cst_8 : f32 to vector<8x32xf32>
    %9 = arith.maximumf %7, %8 : vector<8x32xf32>
    %cst_9 = arith.constant dense<0.000000e+00> : vector<8x32xf32>
    %10 = tpu.matmul %0, %2, %cst_9 {dimension_numbers = #tpu.dot_dimension_numbers<[1], [0], [0], [1], [0, 0, 1, 1], [], []>} : vector<8x16xf32>, vector<16x32xf32>, vector<8x32xf32> -> vector<8x32xf32>
    %c0_10 = arith.constant 0 : index
    %c0_11 = arith.constant 0 : index
    %c0_12 = arith.constant 0 : index
    %11 = vector.load %arg2[%c0_10, %c0_11, %c0_12] : memref<2x32x128xf32, #tpu.memory_space<vmem>>, vector<1x32x128xf32>
    %12 = vector.shape_cast %11 : vector<1x32x128xf32> to vector<32x128xf32>
    %cst_13 = arith.constant dense<0.000000e+00> : vector<8x128xf32>
    %13 = tpu.matmul %9, %12, %cst_13 {dimension_numbers = #tpu.dot_dimension_numbers<[1], [0], [0], [1], [0, 0, 1, 1], [], []>} : vector<8x32xf32>, vector<32x128xf32>, vector<8x128xf32> -> vector<8x128xf32>
    %c0_14 = arith.constant 0 : index
    %c0_15 = arith.constant 0 : index
    %c0_16 = arith.constant 0 : index
    %14 = vector.load %arg3[%c0_14, %c0_15, %c0_16] : memref<2x1x128xf32, #tpu.memory_space<vmem>>, vector<1x1x128xf32>
    %15 = vector.shape_cast %14 : vector<1x1x128xf32> to vector<1x128xf32>
    %16 = vector.broadcast %15 : vector<1x128xf32> to vector<8x128xf32>
    %17 = arith.addf %13, %16 : vector<8x128xf32>
    %18 = vector.extract_strided_slice %17 {offsets = [0, 0], sizes = [8, 96], strides = [1, 1]} : vector<8x128xf32> to vector<8x96xf32>
    %19 = math.tanh %18 : vector<8x96xf32>
    %cst_17 = arith.constant 5.000000e-01 : f32
    %20 = vector.broadcast %cst_17 : f32 to vector<8x96xf32>
    %21 = arith.mulf %20, %19 : vector<8x96xf32>
    %cst_18 = arith.constant 5.000000e-01 : f32
    %22 = vector.broadcast %cst_18 : f32 to vector<8x96xf32>
    %23 = arith.addf %21, %22 : vector<8x96xf32>
    %24 = vector.extract_strided_slice %17 {offsets = [0, 96], sizes = [8, 32], strides = [1, 1]} : vector<8x128xf32> to vector<8x32xf32>
    %25 = math.tanh %24 : vector<8x32xf32>
    %26 = vector.extract_strided_slice %23 {offsets = [0, 0], sizes = [8, 32], strides = [1, 1]} : vector<8x96xf32> to vector<8x32xf32>
    %27 = vector.extract_strided_slice %23 {offsets = [0, 32], sizes = [8, 32], strides = [1, 1]} : vector<8x96xf32> to vector<8x32xf32>
    %28 = vector.extract_strided_slice %23 {offsets = [0, 64], sizes = [8, 32], strides = [1, 1]} : vector<8x96xf32> to vector<8x32xf32>
    %c97 = arith.constant 97 : index
    %c0_19 = arith.constant 0 : index
    %29 = vector.load %arg4[%c97, %c0_19] : memref<104x32xf32, #tpu.memory_space<vmem>>, vector<1x32xf32>
    %30 = vector.broadcast %29 : vector<1x32xf32> to vector<8x32xf32>
    %31 = arith.mulf %27, %30 : vector<8x32xf32>
    %32 = arith.mulf %26, %25 : vector<8x32xf32>
    %33 = arith.addf %31, %32 : vector<8x32xf32>
    %34 = math.tanh %33 : vector<8x32xf32>
    %35 = arith.mulf %28, %34 : vector<8x32xf32>
    %c1 = arith.constant 1 : index
    %c0_20 = arith.constant 0 : index
    %c0_21 = arith.constant 0 : index
    %36 = vector.load %arg2[%c1, %c0_20, %c0_21] : memref<2x32x128xf32, #tpu.memory_space<vmem>>, vector<1x32x128xf32>
    %37 = vector.shape_cast %36 : vector<1x32x128xf32> to vector<32x128xf32>
    %cst_22 = arith.constant dense<0.000000e+00> : vector<8x128xf32>
    %38 = tpu.matmul %35, %37, %cst_22 {dimension_numbers = #tpu.dot_dimension_numbers<[1], [0], [0], [1], [0, 0, 1, 1], [], []>} : vector<8x32xf32>, vector<32x128xf32>, vector<8x128xf32> -> vector<8x128xf32>
    %c1_23 = arith.constant 1 : index
    %c0_24 = arith.constant 0 : index
    %c0_25 = arith.constant 0 : index
    %39 = vector.load %arg3[%c1_23, %c0_24, %c0_25] : memref<2x1x128xf32, #tpu.memory_space<vmem>>, vector<1x1x128xf32>
    %40 = vector.shape_cast %39 : vector<1x1x128xf32> to vector<1x128xf32>
    %41 = vector.broadcast %40 : vector<1x128xf32> to vector<8x128xf32>
    %42 = arith.addf %38, %41 : vector<8x128xf32>
    %43 = vector.extract_strided_slice %42 {offsets = [0, 0], sizes = [8, 96], strides = [1, 1]} : vector<8x128xf32> to vector<8x96xf32>
    %44 = math.tanh %43 : vector<8x96xf32>
    %cst_26 = arith.constant 5.000000e-01 : f32
    %45 = vector.broadcast %cst_26 : f32 to vector<8x96xf32>
    %46 = arith.mulf %45, %44 : vector<8x96xf32>
    %cst_27 = arith.constant 5.000000e-01 : f32
    %47 = vector.broadcast %cst_27 : f32 to vector<8x96xf32>
    %48 = arith.addf %46, %47 : vector<8x96xf32>
    %49 = vector.extract_strided_slice %42 {offsets = [0, 96], sizes = [8, 32], strides = [1, 1]} : vector<8x128xf32> to vector<8x32xf32>
    %50 = math.tanh %49 : vector<8x32xf32>
    %51 = vector.extract_strided_slice %48 {offsets = [0, 0], sizes = [8, 32], strides = [1, 1]} : vector<8x96xf32> to vector<8x32xf32>
    %52 = vector.extract_strided_slice %48 {offsets = [0, 32], sizes = [8, 32], strides = [1, 1]} : vector<8x96xf32> to vector<8x32xf32>
    %53 = vector.extract_strided_slice %48 {offsets = [0, 64], sizes = [8, 32], strides = [1, 1]} : vector<8x96xf32> to vector<8x32xf32>
    %c98 = arith.constant 98 : index
    %c0_28 = arith.constant 0 : index
    %54 = vector.load %arg4[%c98, %c0_28] : memref<104x32xf32, #tpu.memory_space<vmem>>, vector<1x32xf32>
    %55 = vector.broadcast %54 : vector<1x32xf32> to vector<8x32xf32>
    %56 = arith.mulf %52, %55 : vector<8x32xf32>
    %57 = arith.mulf %51, %50 : vector<8x32xf32>
    %58 = arith.addf %56, %57 : vector<8x32xf32>
    %59 = math.tanh %58 : vector<8x32xf32>
    %60 = arith.mulf %53, %59 : vector<8x32xf32>
    %cst_29 = arith.constant dense<0.000000e+00> : vector<8xf32>
    %61 = vector.multi_reduction <add>, %60, %cst_29 [1] : vector<8x32xf32> to vector<8xf32>
    %62 = vector.shape_cast %61 : vector<8xf32> to vector<8x1xf32>
    %cst_30 = arith.constant 3.200000e+01 : f32
    %63 = vector.broadcast %cst_30 : f32 to vector<8x1xf32>
    %64 = arith.divf %62, %63 : vector<8x1xf32>
    %65 = vector.broadcast %64 : vector<8x1xf32> to vector<8x32xf32>
    %66 = arith.subf %60, %65 : vector<8x32xf32>
    %67 = arith.mulf %66, %66 : vector<8x32xf32>
    %cst_31 = arith.constant dense<0.000000e+00> : vector<8xf32>
    %68 = vector.multi_reduction <add>, %67, %cst_31 [1] : vector<8x32xf32> to vector<8xf32>
    %69 = vector.shape_cast %68 : vector<8xf32> to vector<8x1xf32>
    %cst_32 = arith.constant 3.200000e+01 : f32
    %70 = vector.broadcast %cst_32 : f32 to vector<8x1xf32>
    %71 = arith.divf %69, %70 : vector<8x1xf32>
    %72 = vector.broadcast %64 : vector<8x1xf32> to vector<8x32xf32>
    %73 = arith.subf %60, %72 : vector<8x32xf32>
    %cst_33 = arith.constant 9.99999974E-6 : f32
    %74 = vector.broadcast %cst_33 : f32 to vector<8x1xf32>
    %75 = arith.addf %71, %74 : vector<8x1xf32>
    %76 = math.rsqrt %75 : vector<8x1xf32>
    %77 = vector.broadcast %76 : vector<8x1xf32> to vector<8x32xf32>
    %78 = arith.mulf %73, %77 : vector<8x32xf32>
    %cst_34 = arith.constant dense<0.000000e+00> : vector<8x32xf32>
    %79 = tpu.matmul %78, %3, %cst_34 {dimension_numbers = #tpu.dot_dimension_numbers<[1], [0], [0], [1], [0, 0, 1, 1], [], []>} : vector<8x32xf32>, vector<32x32xf32>, vector<8x32xf32> -> vector<8x32xf32>
    %80 = vector.broadcast %5 : vector<1x32xf32> to vector<8x32xf32>
    %81 = arith.addf %79, %80 : vector<8x32xf32>
    %82 = math.tanh %81 : vector<8x32xf32>
    %cst_35 = arith.constant dense<0.000000e+00> : vector<8x32xf32>
    %83 = tpu.matmul %82, %4, %cst_35 {dimension_numbers = #tpu.dot_dimension_numbers<[1], [0], [0], [1], [0, 0, 1, 1], [], []>} : vector<8x32xf32>, vector<32x32xf32>, vector<8x32xf32> -> vector<8x32xf32>
    %84 = vector.extract_strided_slice %83 {offsets = [0, 0], sizes = [8, 1], strides = [1, 1]} : vector<8x32xf32> to vector<8x1xf32>
    %85 = vector.broadcast %6 : vector<1x1xf32> to vector<8x1xf32>
    %86 = arith.addf %84, %85 : vector<8x1xf32>
    %87 = math.tanh %86 : vector<8x1xf32>
    %88 = vector.extract_strided_slice %0 {offsets = [0, 11], sizes = [8, 1], strides = [1, 1]} : vector<8x16xf32> to vector<8x1xf32>
    %89 = vector.extract_strided_slice %0 {offsets = [0, 12], sizes = [8, 1], strides = [1, 1]} : vector<8x16xf32> to vector<8x1xf32>
    %90 = vector.extract_strided_slice %10 {offsets = [0, 0], sizes = [8, 1], strides = [1, 1]} : vector<8x32xf32> to vector<8x1xf32>
    %91 = vector.extract_strided_slice %10 {offsets = [0, 1], sizes = [8, 1], strides = [1, 1]} : vector<8x32xf32> to vector<8x1xf32>
    %92 = vector.extract_strided_slice %10 {offsets = [0, 2], sizes = [8, 1], strides = [1, 1]} : vector<8x32xf32> to vector<8x1xf32>
    %93 = vector.extract_strided_slice %10 {offsets = [0, 3], sizes = [8, 1], strides = [1, 1]} : vector<8x32xf32> to vector<8x1xf32>
    %94 = vector.extract_strided_slice %10 {offsets = [0, 4], sizes = [8, 1], strides = [1, 1]} : vector<8x32xf32> to vector<8x1xf32>
    %cst_36 = arith.constant 5.000000e-02 : f32
    %95 = vector.broadcast %cst_36 : f32 to vector<8x1xf32>
    %96 = arith.cmpf ogt, %88, %95 : vector<8x1xf32>
    %97 = math.absf %92 : vector<8x1xf32>
    %cst_37 = arith.constant 9.99999997E-7 : f32
    %98 = vector.broadcast %cst_37 : f32 to vector<8x1xf32>
    %99 = arith.cmpf ogt, %97, %98 : vector<8x1xf32>
    %100 = arith.andi %96, %99 : vector<8x1xi1>
    %cst_38 = arith.constant 5.000000e-01 : f32
    %101 = vector.broadcast %cst_38 : f32 to vector<8x1xf32>
    %102 = arith.cmpf ogt, %89, %101 : vector<8x1xf32>
    %cst_39 = arith.constant 5.000000e-01 : f32
    %103 = vector.broadcast %cst_39 : f32 to vector<8x1xf32>
    %104 = arith.cmpf olt, %89, %103 : vector<8x1xf32>
    %cst_40 = arith.constant 0.000000e+00 : f32
    %105 = vector.broadcast %cst_40 : f32 to vector<8x1xf32>
    %106 = arith.select %104, %94, %105 : vector<8x1xi1>, vector<8x1xf32>
    %107 = arith.select %102, %93, %106 : vector<8x1xi1>, vector<8x1xf32>
    %108 = arith.addf %90, %107 : vector<8x1xf32>
    %109 = arith.select %100, %108, %90 : vector<8x1xi1>, vector<8x1xf32>
    %cst_41 = arith.constant 1.000000e-01 : f32
    %110 = vector.broadcast %cst_41 : f32 to vector<8x1xf32>
    %111 = arith.mulf %87, %110 : vector<8x1xf32>
    %112 = arith.addf %111, %91 : vector<8x1xf32>
    %cst_42 = arith.constant 9.99999997E-7 : f32
    %113 = vector.broadcast %cst_42 : f32 to vector<8x1xf32>
    %114 = arith.cmpf olt, %89, %113 : vector<8x1xf32>
    %115 = arith.addf %112, %109 : vector<8x1xf32>
    %cst_43 = arith.constant 0.000000e+00 : f32
    %116 = vector.broadcast %cst_43 : f32 to vector<8x1xf32>
    %117 = arith.select %114, %116, %115 : vector<8x1xi1>, vector<8x1xf32>
    %118 = tpu.concatenate %35, %60, %33, %58 in 1 : vector<8x32xf32>, vector<8x32xf32>, vector<8x32xf32>, vector<8x32xf32> -> vector<8x128xf32>
    %c0_44 = arith.constant 0 : index
    %c0_45 = arith.constant 0 : index
    %119 = vector.load %arg5[%c0_44, %c0_45] : memref<8x136xf32, #tpu.memory_space<vmem>>, vector<8x128xf32>
    tpu.vector_store %arg5[%c0_44, %c0_45], %118 {strides = array<i32>} : memref<8x136xf32, #tpu.memory_space<vmem>>, vector<8x128xf32>,
    %cst_46 = arith.constant 0.000000e+00 : f32
    %120 = vector.broadcast %cst_46 : f32 to vector<8x5xf32>
    %121 = tpu.concatenate %117, %112, %109, %120 in 1 : vector<8x1xf32>, vector<8x1xf32>, vector<8x1xf32>, vector<8x5xf32> -> vector<8x8xf32>
    %c0_47 = arith.constant 0 : index
    %c128 = arith.constant 128 : index
    %122 = vector.load %arg5[%c0_47, %c128] : memref<8x136xf32, #tpu.memory_space<vmem>>, vector<8x8xf32>
    tpu.vector_store %arg5[%c0_47, %c128], %121 {strides = array<i32>} : memref<8x136xf32, #tpu.memory_space<vmem>>, vector<8x8xf32>,
    return
  }
  func.func @transform_0(%arg0: i32) -> (i32, i32) {
    %c0_i32 = arith.constant 0 : i32
    %c0_i32_0 = arith.constant 0 : i32
    return %arg0, %c0_i32 : i32, i32
  }
  func.func @transform_1(%arg0: i32) -> (i32, i32, i32) {
    %c0_i32 = arith.constant 0 : i32
    %c0_i32_0 = arith.constant 0 : i32
    %c0_i32_1 = arith.constant 0 : i32
    %c0_i32_2 = arith.constant 0 : i32
    return %c0_i32, %c0_i32_0, %c0_i32_1 : i32, i32, i32
  }
  func.func @transform_2(%arg0: i32) -> (i32, i32, i32) {
    %c0_i32 = arith.constant 0 : i32
    %c0_i32_0 = arith.constant 0 : i32
    %c0_i32_1 = arith.constant 0 : i32
    %c0_i32_2 = arith.constant 0 : i32
    return %c0_i32, %c0_i32_0, %c0_i32_1 : i32, i32, i32
  }
  func.func @transform_3(%arg0: i32) -> (i32, i32) {
    %c0_i32 = arith.constant 0 : i32
    %c0_i32_0 = arith.constant 0 : i32
    %c0_i32_1 = arith.constant 0 : i32
    return %c0_i32, %c0_i32_0 : i32, i32
  }
  func.func @transform_4(%arg0: i32) -> (i32, i32) {
    %c0_i32 = arith.constant 0 : i32
    %c0_i32_0 = arith.constant 0 : i32
    return %arg0, %c0_i32 : i32, i32
  }
}

</mosaic_0001>

<llo_original>
// kernel: pcnn_forward.1
$region0: #{pcnn_forward.1}
  #allocation0 [shape = 'u32[]', space=smem, size = 0x4, offset = 0x4, fixed_abs, tag = 'smem constant byte address 0x4 - core index']
  #allocation1 [shape = 'u32[144,128]{1,0:T(1,128)}', space=vmem, size = 0x12000, scoped, tag = 'internal scratch']
  %s0 = inlined_call_operand.vmem [shape: f32[8,16], index: 0, kind: input, shape index: {}]
  %s1 = inlined_call_operand.vmem [shape: f32[2,32,128], index: 1, kind: input, shape index: {}]
  %s2 = inlined_call_operand.vmem [shape: f32[2,1,128], index: 2, kind: input, shape index: {}]
  %s3 = inlined_call_operand.vmem [shape: f32[104,32], index: 3, kind: input, shape index: {}]
  %s4 = inlined_call_operand.vmem [shape: f32[8,136], index: 4, kind: output, shape index: {}]
  %s5 = sld [smem:[#allocation0]]
  $region26: #{pcnn_forward.1} parent=0
    _
  %s7 = ssub.s32 1, %s5
  %s8 = scalar_select 0, %s7, %s5
  // Predicated region
  $region2: #{pcnn_forward.1} parent=0 // pred_check
    _
  $region3: #{pcnn_forward.1} parent=0 // pred_check_branch
    %10 = sbr.rel (0) target = $region5
  $region4: #{pcnn_forward.1} parent=0 // pred_region
    _
  $region5: #{pcnn_forward.1} parent=0 // pred_fallthru
    _
  // Predicated region
  $region6: #{pcnn_forward.1} parent=0 // pred_check
    _
  $region7: #{pcnn_forward.1} parent=0 // pred_check_branch
    %12 = sbr.rel (0) target = $region9
  $region8: #{pcnn_forward.1} parent=0 // pred_region
    _
  $region9: #{pcnn_forward.1} parent=0 // pred_fallthru
    _
  // Predicated region
  $region10: #{pcnn_forward.1} parent=0 // pred_check
    _
  $region11: #{pcnn_forward.1} parent=0 // pred_check_branch
    %14 = sbr.rel (0) target = $region13
  $region12: #{pcnn_forward.1} parent=0 // pred_region
    _
  $region13: #{pcnn_forward.1} parent=0 // pred_fallthru
    _
  // Predicated region
  $region14: #{pcnn_forward.1} parent=0 // pred_check
    _
  $region15: #{pcnn_forward.1} parent=0 // pred_check_branch
    %16 = sbr.rel (0) target = $region17
  $region16: #{pcnn_forward.1} parent=0 // pred_region
    _
  $region17: #{pcnn_forward.1} parent=0 // pred_fallthru
    _
  %v17 = vld [vmem:[%s0] sm:$0xff]
  %v18 = vld [vmem:[%s3] sm:$0xff]
  %v19 = vld [vmem:[%s3 + $0x8] sm:$0xff]
  %v20 = vld [vmem:[%s3 + $0x10] sm:$0xff]
  %v21 = vld [vmem:[%s3 + $0x18] sm:$0xff]
  %v22 = vld [vmem:[%s3 + $0x20] sm:$0xff]
  %v23 = vld [vmem:[%s3 + $0x28] sm:$0xff]
  %v24 = vld [vmem:[%s3 + $0x30] sm:$0xff]
  %v25 = vld [vmem:[%s3 + $0x38] sm:$0xff]
  %v26 = vld [vmem:[%s3 + $0x40] sm:$0xff]
  %v27 = vld [vmem:[%s3 + $0x48] sm:$0xff]
  %v28 = vld [vmem:[%s3 + $0x50] sm:$0xff]
  %v29 = vld [vmem:[%s3 + $0x58] sm:$0xff]
  %v30 = vld [vmem:[%s3 + $0x60] sm:$0x1]
  %v31 = vld [vmem:[%s3 + $0x63] sm:$0x1]
  %vm32 = vcmask 130048
  %v34 = vsel %vm32, %v17, 0
  %36 = vmatprep.subr.mxu0 0.0
  %37 = vmatpush1.msra.mxu0 %v18
  %38 = vmatprep.subr.mxu0 0.0
  %39 = vmatpush1.msra.mxu0 %v19
  %40 = vmatprep.subr.mxu0 0.0
  %41 = vmatpush1.msra.mxu0 0.0
  %42 = vmatprep.subr.mxu0 0.0
  %43 = vmatpush1.msra.mxu0 0.0
  %44 = vmatprep.subr.mxu0 0.0
  %45 = vmatpush1.msra.mxu0 0.0
  %46 = vmatprep.subr.mxu0 0.0
  %47 = vmatpush1.msra.mxu0 0.0
  %48 = vmatprep.subr.mxu0 0.0
  %49 = vmatpush1.msra.mxu0 0.0
  %50 = vmatprep.subr.mxu0 0.0
  %51 = vmatpush1.msra.mxu0 0.0
  %52 = vmatprep.subr.mxu0 0.0
  %53 = vmatpush1.msra.mxu0 0.0
  %54 = vmatprep.subr.mxu0 0.0
  %55 = vmatpush1.msra.mxu0 0.0
  %56 = vmatprep.subr.mxu0 0.0
  %57 = vmatpush1.msra.mxu0 0.0
  %58 = vmatprep.subr.mxu0 0.0
  %59 = vmatpush1.msra.mxu0 0.0
  %60 = vmatprep.subr.mxu0 0.0
  %61 = vmatpush1.msra.mxu0 0.0
  %62 = vmatprep.subr.mxu0 0.0
  %63 = vmatpush1.msra.mxu0 0.0
  %64 = vmatprep.subr.mxu0 0.0
  %65 = vmatpush1.msra.mxu0 0.0
  %66 = vmatprep.subr.mxu0 0.0
  %67 = vmatpush1.msra.mxu0 0.0
  %68 = vmatprep.subr.mxu0 0.0
  %69 = vmatpush1.msra.mxu0 0.0
  %70 = vmatprep.subr.mxu0 0.0
  %71 = vmatpush1.msra.mxu0 0.0
  %72 = vmatprep.subr.mxu0 0.0
  %73 = vmatpush1.msra.mxu0 0.0
  %74 = vmatprep.subr.mxu0 0.0
  %75 = vmatpush1.msra.mxu0 0.0
  %76 = vmatprep.subr.mxu0 0.0
  %77 = vmatpush1.msra.mxu0 0.0
  %78 = vmatprep.subr.mxu0 0.0
  %79 = vmatpush1.msra.mxu0 0.0
  %80 = vmatprep.subr.mxu0 0.0
  %81 = vmatpush1.msra.mxu0 0.0
  %82 = vmatprep.subr.mxu0 0.0
  %83 = vmatpush1.msra.mxu0 0.0
  %84 = vmatprep.subr.mxu0 0.0
  %85 = vmatpush1.msra.mxu0 0.0
  %86 = vmatprep.subr.mxu0 0.0
  %87 = vmatpush1.msra.mxu0 0.0
  %88 = vmatprep.subr.mxu0 0.0
  %89 = vmatpush1.msra.mxu0 0.0
  %90 = vmatprep.subr.mxu0 0.0
  %91 = vmatpush1.msra.mxu0 0.0
  %92 = vmatprep.subr.mxu0 0.0
  %93 = vmatpush1.msra.mxu0 0.0
  %94 = vmatprep.subr.mxu0 0.0
  %95 = vmatpush1.msra.mxu0 0.0
  %96 = vmatprep.subr.mxu0 0.0
  %97 = vmatpush1.msra.mxu0 0.0
  %98 = vmatprep.subr.mxu0 0.0
  %99 = vmatpush1.msra.mxu0 0.0
  %100 = vmatprep.mubr.f32.mxu0 0.0
  %101 = vmatmul.mubr.f32.gmra.mrb[0].mxu0 %v34
  %v102 = vpop.f32.mrb[0].mxu0
  %v103 = vadd.f32 0.0, %v102
  %v104 = vpop.f32.mrb[0].mxu0
  %105 = vdwg.mxu0
  %v106 = vmax.f32 %v103, 0.0
  %107 = vmatprep.subr.mxu0 0.0
  %108 = vmatpush1.msra.mxu0 %v20
  %109 = vmatprep.subr.mxu0 0.0
  %110 = vmatpush1.msra.mxu0 %v21
  %111 = vmatprep.subr.mxu0 0.0
  %112 = vmatpush1.msra.mxu0 0.0
  %113 = vmatprep.subr.mxu0 0.0
  %114 = vmatpush1.msra.mxu0 0.0
  %115 = vmatprep.subr.mxu0 0.0
  %116 = vmatpush1.msra.mxu0 0.0
  %117 = vmatprep.subr.mxu0 0.0
  %118 = vmatpush1.msra.mxu0 0.0
  %119 = vmatprep.subr.mxu0 0.0
  %120 = vmatpush1.msra.mxu0 0.0
  %121 = vmatprep.subr.mxu0 0.0
  %122 = vmatpush1.msra.mxu0 0.0
  %123 = vmatprep.subr.mxu0 0.0
  %124 = vmatpush1.msra.mxu0 0.0
  %125 = vmatprep.subr.mxu0 0.0
  %126 = vmatpush1.msra.mxu0 0.0
  %127 = vmatprep.subr.mxu0 0.0
  %128 = vmatpush1.msra.mxu0 0.0
  %129 = vmatprep.subr.mxu0 0.0
  %130 = vmatpush1.msra.mxu0 0.0
  %131 = vmatprep.subr.mxu0 0.0
  %132 = vmatpush1.msra.mxu0 0.0
  %133 = vmatprep.subr.mxu0 0.0
  %134 = vmatpush1.msra.mxu0 0.0
  %135 = vmatprep.subr.mxu0 0.0
  %136 = vmatpush1.msra.mxu0 0.0
  %137 = vmatprep.subr.mxu0 0.0
  %138 = vmatpush1.msra.mxu0 0.0
  %139 = vmatprep.subr.mxu0 0.0
  %140 = vmatpush1.msra.mxu0 0.0
  %141 = vmatprep.subr.mxu0 0.0
  %142 = vmatpush1.msra.mxu0 0.0
  %143 = vmatprep.subr.mxu0 0.0
  %144 = vmatpush1.msra.mxu0 0.0
  %145 = vmatprep.subr.mxu0 0.0
  %146 = vmatpush1.msra.mxu0 0.0
  %147 = vmatprep.subr.mxu0 0.0
  %148 = vmatpush1.msra.mxu0 0.0
  %149 = vmatprep.subr.mxu0 0.0
  %150 = vmatpush1.msra.mxu0 0.0
  %151 = vmatprep.subr.mxu0 0.0
  %152 = vmatpush1.msra.mxu0 0.0
  %153 = vmatprep.subr.mxu0 0.0
  %154 = vmatpush1.msra.mxu0 0.0
  %155 = vmatprep.subr.mxu0 0.0
  %156 = vmatpush1.msra.mxu0 0.0
  %157 = vmatprep.subr.mxu0 0.0
  %158 = vmatpush1.msra.mxu0 0.0
  %159 = vmatprep.subr.mxu0 0.0
  %160 = vmatpush1.msra.mxu0 0.0
  %161 = vmatprep.subr.mxu0 0.0
  %162 = vmatpush1.msra.mxu0 0.0
  %163 = vmatprep.subr.mxu0 0.0
  %164 = vmatpush1.msra.mxu0 0.0
  %165 = vmatprep.subr.mxu0 0.0
  %166 = vmatpush1.msra.mxu0 0.0
  %167 = vmatprep.subr.mxu0 0.0
  %168 = vmatpush1.msra.mxu0 0.0
  %169 = vmatprep.subr.mxu0 0.0
  %170 = vmatpush1.msra.mxu0 0.0
  %171 = vmatprep.mubr.f32.mxu0 0.0
  %172 = vmatmul.mubr.f32.gmra.mrb[0].mxu0 %v34
  %v173 = vpop.f32.mrb[0].mxu0
  %v174 = vadd.f32 0.0, %v173
  %v175 = vpop.f32.mrb[0].mxu0
  %176 = vdwg.mxu0
  %v177 = vld [vmem:[%s1] sm:$0xff]
  %v178 = vld [vmem:[%s1 + $0x8] sm:$0xff]
  %v179 = vld [vmem:[%s1 + $0x10] sm:$0xff]
  %v180 = vld [vmem:[%s1 + $0x18] sm:$0xff]
  %v181 = vld [vmem:[%s2] sm:$0x1]
  %v183 = vlaneseq
  %v184 = vshrl.u32 %v183, 7
  %v185 = vsub.s32 0, %v184
  %v186 = vrot.slane %v181, %v185
  %vm188 = vcmask 261120
  %v190 = vsel %vm188, %v106, 0
  %192 = vmatprep.subr.mxu0 0.0
  %193 = vmatpush1.msra.mxu0 %v177
  %194 = vmatprep.subr.mxu0 0.0
  %195 = vmatpush1.msra.mxu0 %v178
  %196 = vmatprep.subr.mxu0 0.0
  %197 = vmatpush1.msra.mxu0 %v179
  %198 = vmatprep.subr.mxu0 0.0
  %199 = vmatpush1.msra.mxu0 %v180
  %200 = vmatprep.subr.mxu0 0.0
  %201 = vmatpush1.msra.mxu0 0.0
  %202 = vmatprep.subr.mxu0 0.0
  %203 = vmatpush1.msra.mxu0 0.0
  %204 = vmatprep.subr.mxu0 0.0
  %205 = vmatpush1.msra.mxu0 0.0
  %206 = vmatprep.subr.mxu0 0.0
  %207 = vmatpush1.msra.mxu0 0.0
  %208 = vmatprep.subr.mxu0 0.0
  %209 = vmatpush1.msra.mxu0 0.0
  %210 = vmatprep.subr.mxu0 0.0
  %211 = vmatpush1.msra.mxu0 0.0
  %212 = vmatprep.subr.mxu0 0.0
  %213 = vmatpush1.msra.mxu0 0.0
  %214 = vmatprep.subr.mxu0 0.0
  %215 = vmatpush1.msra.mxu0 0.0
  %216 = vmatprep.subr.mxu0 0.0
  %217 = vmatpush1.msra.mxu0 0.0
  %218 = vmatprep.subr.mxu0 0.0
  %219 = vmatpush1.msra.mxu0 0.0
  %220 = vmatprep.subr.mxu0 0.0
  %221 = vmatpush1.msra.mxu0 0.0
  %222 = vmatprep.subr.mxu0 0.0
  %223 = vmatpush1.msra.mxu0 0.0
  %224 = vmatprep.subr.mxu0 0.0
  %225 = vmatpush1.msra.mxu0 0.0
  %226 = vmatprep.subr.mxu0 0.0
  %227 = vmatpush1.msra.mxu0 0.0
  %228 = vmatprep.subr.mxu0 0.0
  %229 = vmatpush1.msra.mxu0 0.0
  %230 = vmatprep.subr.mxu0 0.0
  %231 = vmatpush1.msra.mxu0 0.0
  %232 = vmatprep.subr.mxu0 0.0
  %233 = vmatpush1.msra.mxu0 0.0
  %234 = vmatprep.subr.mxu0 0.0
  %235 = vmatpush1.msra.mxu0 0.0
  %236 = vmatprep.subr.mxu0 0.0
  %237 = vmatpush1.msra.mxu0 0.0
  %238 = vmatprep.subr.mxu0 0.0
  %239 = vmatpush1.msra.mxu0 0.0
  %240 = vmatprep.subr.mxu0 0.0
  %241 = vmatpush1.msra.mxu0 0.0
  %242 = vmatprep.subr.mxu0 0.0
  %243 = vmatpush1.msra.mxu0 0.0
  %244 = vmatprep.subr.mxu0 0.0
  %245 = vmatpush1.msra.mxu0 0.0
  %246 = vmatprep.subr.mxu0 0.0
  %247 = vmatpush1.msra.mxu0 0.0
  %248 = vmatprep.subr.mxu0 0.0
  %249 = vmatpush1.msra.mxu0 0.0
  %250 = vmatprep.subr.mxu0 0.0
  %251 = vmatpush1.msra.mxu0 0.0
  %252 = vmatprep.subr.mxu0 0.0
  %253 = vmatpush1.msra.mxu0 0.0
  %254 = vmatprep.subr.mxu0 0.0
  %255 = vmatpush1.msra.mxu0 0.0
  %256 = vmatprep.mubr.f32.mxu0 0.0
  %257 = vmatmul.mubr.f32.gmra.mrb[0].mxu0 %v190
  %v258 = vpop.f32.mrb[0].mxu0
  %v259 = vadd.f32 %v186, %v258
  %v260 = vpop.f32.mrb[0].mxu0
  %261 = vdwg.mxu0
  %v262 = vtanh.pop %v259
  %v263 = vmul.f32 %v262, 0.5
  %v264 = vadd.f32 %v263, 0.5
  %v265 = vld [vmem:[%s3 + $0x61] sm:$0x1]
  %v266 = vlaneseq
  %v267 = vshrl.u32 %v266, 7
  %v268 = vsub.s32 0, %v267
  %v269 = vrot.slane %v265, %v268
  %271 = vrot.lane.b32.xlu0 %v269, 32
  %v272 = vpop.permute.xlu0 %271
  %v274 = vmul.f32 %v264, %v272
  %276 = vrot.lane.b32.xlu0 %v262, 32
  %v277 = vpop.permute.xlu0 %276
  %v279 = vmul.f32 %v264, %v277
  %281 = vrot.lane.b32.xlu0 %v279, 32
  %v282 = vpop.permute.xlu0 %281
  %v284 = vadd.f32 %v274, %v282
  %v285 = vtanh.pop %v284
  %287 = vrot.lane.b32.xlu0 %v285, 32
  %v288 = vpop.permute.xlu0 %287
  %v290 = vmul.f32 %v264, %v288
  %s291 = scalar_lea.vmem %s1, 32
  %v292 = vld [vmem:[%s291] sm:$0xff]
  %v293 = vld [vmem:[%s291 + $0x8] sm:$0xff]
  %v294 = vld [vmem:[%s291 + $0x10] sm:$0xff]
  %v295 = vld [vmem:[%s291 + $0x18] sm:$0xff]
  %s296 = scalar_lea.vmem %s2, 1
  %v297 = vld [vmem:[%s296] sm:$0x1]
  %v299 = vlaneseq
  %v300 = vshrl.u32 %v299, 7
  %v301 = vsub.s32 0, %v300
  %v302 = vrot.slane %v297, %v301
  %305 = vrot.lane.b32.xlu0 %v290, 64
  %v306 = vpop.permute.xlu0 %305
  %v307 = vsel %vm188, %v306, 0
  %309 = vmatprep.subr.mxu0 0.0
  %310 = vmatpush1.msra.mxu0 %v292
  %311 = vmatprep.subr.mxu0 0.0
  %312 = vmatpush1.msra.mxu0 %v293
  %313 = vmatprep.subr.mxu0 0.0
  %314 = vmatpush1.msra.mxu0 %v294
  %315 = vmatprep.subr.mxu0 0.0
  %316 = vmatpush1.msra.mxu0 %v295
  %317 = vmatprep.subr.mxu0 0.0
  %318 = vmatpush1.msra.mxu0 0.0
  %319 = vmatprep.subr.mxu0 0.0
  %320 = vmatpush1.msra.mxu0 0.0
  %321 = vmatprep.subr.mxu0 0.0
  %322 = vmatpush1.msra.mxu0 0.0
  %323 = vmatprep.subr.mxu0 0.0
  %324 = vmatpush1.msra.mxu0 0.0
  %325 = vmatprep.subr.mxu0 0.0
  %326 = vmatpush1.msra.mxu0 0.0
  %327 = vmatprep.subr.mxu0 0.0
  %328 = vmatpush1.msra.mxu0 0.0
  %329 = vmatprep.subr.mxu0 0.0
  %330 = vmatpush1.msra.mxu0 0.0
  %331 = vmatprep.subr.mxu0 0.0
  %332 = vmatpush1.msra.mxu0 0.0
  %333 = vmatprep.subr.mxu0 0.0
  %334 = vmatpush1.msra.mxu0 0.0
  %335 = vmatprep.subr.mxu0 0.0
  %336 = vmatpush1.msra.mxu0 0.0
  %337 = vmatprep.subr.mxu0 0.0
  %338 = vmatpush1.msra.mxu0 0.0
  %339 = vmatprep.subr.mxu0 0.0
  %340 = vmatpush1.msra.mxu0 0.0
  %341 = vmatprep.subr.mxu0 0.0
  %342 = vmatpush1.msra.mxu0 0.0
  %343 = vmatprep.subr.mxu0 0.0
  %344 = vmatpush1.msra.mxu0 0.0
  %345 = vmatprep.subr.mxu0 0.0
  %346 = vmatpush1.msra.mxu0 0.0
  %347 = vmatprep.subr.mxu0 0.0
  %348 = vmatpush1.msra.mxu0 0.0
  %349 = vmatprep.subr.mxu0 0.0
  %350 = vmatpush1.msra.mxu0 0.0
  %351 = vmatprep.subr.mxu0 0.0
  %352 = vmatpush1.msra.mxu0 0.0
  %353 = vmatprep.subr.mxu0 0.0
  %354 = vmatpush1.msra.mxu0 0.0
  %355 = vmatprep.subr.mxu0 0.0
  %356 = vmatpush1.msra.mxu0 0.0
  %357 = vmatprep.subr.mxu0 0.0
  %358 = vmatpush1.msra.mxu0 0.0
  %359 = vmatprep.subr.mxu0 0.0
  %360 = vmatpush1.msra.mxu0 0.0
  %361 = vmatprep.subr.mxu0 0.0
  %362 = vmatpush1.msra.mxu0 0.0
  %363 = vmatprep.subr.mxu0 0.0
  %364 = vmatpush1.msra.mxu0 0.0
  %365 = vmatprep.subr.mxu0 0.0
  %366 = vmatpush1.msra.mxu0 0.0
  %367 = vmatprep.subr.mxu0 0.0
  %368 = vmatpush1.msra.mxu0 0.0
  %369 = vmatprep.subr.mxu0 0.0
  %370 = vmatpush1.msra.mxu0 0.0
  %371 = vmatprep.subr.mxu0 0.0
  %372 = vmatpush1.msra.mxu0 0.0
  %373 = vmatprep.mubr.f32.mxu0 0.0
  %374 = vmatmul.mubr.f32.gmra.mrb[0].mxu0 %v307
  %v375 = vpop.f32.mrb[0].mxu0
  %v376 = vadd.f32 %v302, %v375
  %v377 = vpop.f32.mrb[0].mxu0
  %378 = vdwg.mxu0
  %v379 = vtanh.pop %v376
  %v380 = vmul.f32 %v379, 0.5
  %v381 = vadd.f32 %v380, 0.5
  %v382 = vld [vmem:[%s3 + $0x62] sm:$0x1]
  %v383 = vlaneseq
  %v384 = vshrl.u32 %v383, 7
  %v385 = vsub.s32 0, %v384
  %v386 = vrot.slane %v382, %v385
  %388 = vrot.lane.b32.xlu0 %v386, 32
  %v389 = vpop.permute.xlu0 %388
  %v391 = vmul.f32 %v381, %v389
  %393 = vrot.lane.b32.xlu0 %v379, 32
  %v394 = vpop.permute.xlu0 %393
  %v396 = vmul.f32 %v381, %v394
  %398 = vrot.lane.b32.xlu0 %v396, 32
  %v399 = vpop.permute.xlu0 %398
  %v401 = vadd.f32 %v391, %v399
  %v402 = vtanh.pop %v401
  %404 = vrot.lane.b32.xlu0 %v402, 32
  %v405 = vpop.permute.xlu0 %404
  %v407 = vmul.f32 %v381, %v405
  %409 = vrot.lane.b32.xlu0 %v407, 64
  %v410 = vpop.permute.xlu0 %409
  %v412 = vsel %vm188, %v410, 0.0
  %413 = vadd.xlane.f32.xlu0 %v412
  %v414 = vpop.xlane.xlu0 %413
  %v415 = vrcp.pop 32.0
  %v416 = vmul.f32 %v414, %v415
  %v417 = vsub.f32 %v407, %v416
  %v418 = vmul.f32 %v417, %v417
  %420 = vrot.lane.b32.xlu0 %v418, 64
  %v421 = vpop.permute.xlu0 %420
  %v423 = vsel %vm188, %v421, 0.0
  %424 = vadd.xlane.f32.xlu0 %v423
  %v425 = vpop.xlane.xlu0 %424
  %v426 = vmul.f32 %v425, %v415
  %v427 = vadd.f32 %v426, 1e-05
  %v428 = vrsqrt.pop %v427
  %v429 = vmul.f32 %v417, %v428
  %v430 = vlaneseq
  %v431 = vshrl.u32 %v430, 7
  %v432 = vsub.s32 0, %v431
  %v433 = vrot.slane %v30, %v432
  %435 = vrot.lane.b32.xlu0 %v429, 64
  %v436 = vpop.permute.xlu0 %435
  %v437 = vsel %vm188, %v436, 0
  %439 = vmatprep.subr.mxu0 0.0
  %440 = vmatpush1.msra.mxu0 %v22
  %441 = vmatprep.subr.mxu0 0.0
  %442 = vmatpush1.msra.mxu0 %v23
  %443 = vmatprep.subr.mxu0 0.0
  %444 = vmatpush1.msra.mxu0 %v24
  %445 = vmatprep.subr.mxu0 0.0
  %446 = vmatpush1.msra.mxu0 %v25
  %447 = vmatprep.subr.mxu0 0.0
  %448 = vmatpush1.msra.mxu0 0.0
  %449 = vmatprep.subr.mxu0 0.0
  %450 = vmatpush1.msra.mxu0 0.0
  %451 = vmatprep.subr.mxu0 0.0
  %452 = vmatpush1.msra.mxu0 0.0
  %453 = vmatprep.subr.mxu0 0.0
  %454 = vmatpush1.msra.mxu0 0.0
  %455 = vmatprep.subr.mxu0 0.0
  %456 = vmatpush1.msra.mxu0 0.0
  %457 = vmatprep.subr.mxu0 0.0
  %458 = vmatpush1.msra.mxu0 0.0
  %459 = vmatprep.subr.mxu0 0.0
  %460 = vmatpush1.msra.mxu0 0.0
  %461 = vmatprep.subr.mxu0 0.0
  %462 = vmatpush1.msra.mxu0 0.0
  %463 = vmatprep.subr.mxu0 0.0
  %464 = vmatpush1.msra.mxu0 0.0
  %465 = vmatprep.subr.mxu0 0.0
  %466 = vmatpush1.msra.mxu0 0.0
  %467 = vmatprep.subr.mxu0 0.0
  %468 = vmatpush1.msra.mxu0 0.0
  %469 = vmatprep.subr.mxu0 0.0
  %470 = vmatpush1.msra.mxu0 0.0
  %471 = vmatprep.subr.mxu0 0.0
  %472 = vmatpush1.msra.mxu0 0.0
  %473 = vmatprep.subr.mxu0 0.0
  %474 = vmatpush1.msra.mxu0 0.0
  %475 = vmatprep.subr.mxu0 0.0
  %476 = vmatpush1.msra.mxu0 0.0
  %477 = vmatprep.subr.mxu0 0.0
  %478 = vmatpush1.msra.mxu0 0.0
  %479 = vmatprep.subr.mxu0 0.0
  %480 = vmatpush1.msra.mxu0 0.0
  %481 = vmatprep.subr.mxu0 0.0
  %482 = vmatpush1.msra.mxu0 0.0
  %483 = vmatprep.subr.mxu0 0.0
  %484 = vmatpush1.msra.mxu0 0.0
  %485 = vmatprep.subr.mxu0 0.0
  %486 = vmatpush1.msra.mxu0 0.0
  %487 = vmatprep.subr.mxu0 0.0
  %488 = vmatpush1.msra.mxu0 0.0
  %489 = vmatprep.subr.mxu0 0.0
  %490 = vmatpush1.msra.mxu0 0.0
  %491 = vmatprep.subr.mxu0 0.0
  %492 = vmatpush1.msra.mxu0 0.0
  %493 = vmatprep.subr.mxu0 0.0
  %494 = vmatpush1.msra.mxu0 0.0
  %495 = vmatprep.subr.mxu0 0.0
  %496 = vmatpush1.msra.mxu0 0.0
  %497 = vmatprep.subr.mxu0 0.0
  %498 = vmatpush1.msra.mxu0 0.0
  %499 = vmatprep.subr.mxu0 0.0
  %500 = vmatpush1.msra.mxu0 0.0
  %501 = vmatprep.subr.mxu0 0.0
  %502 = vmatpush1.msra.mxu0 0.0
  %503 = vmatprep.mubr.f32.mxu0 0.0
  %504 = vmatmul.mubr.f32.gmra.mrb[0].mxu0 %v437
  %v505 = vpop.f32.mrb[0].mxu0
  %v506 = vadd.f32 %v433, %v505
  %v507 = vpop.f32.mrb[0].mxu0
  %508 = vdwg.mxu0
  %v509 = vtanh.pop %v506
  %v511 = vsel %vm188, %v509, 0
  %513 = vmatprep.subr.mxu0 0.0
  %514 = vmatpush1.msra.mxu0 %v26
  %515 = vmatprep.subr.mxu0 0.0
  %516 = vmatpush1.msra.mxu0 %v27
  %517 = vmatprep.subr.mxu0 0.0
  %518 = vmatpush1.msra.mxu0 %v28
  %519 = vmatprep.subr.mxu0 0.0
  %520 = vmatpush1.msra.mxu0 %v29
  %521 = vmatprep.subr.mxu0 0.0
  %522 = vmatpush1.msra.mxu0 0.0
  %523 = vmatprep.subr.mxu0 0.0
  %524 = vmatpush1.msra.mxu0 0.0
  %525 = vmatprep.subr.mxu0 0.0
  %526 = vmatpush1.msra.mxu0 0.0
  %527 = vmatprep.subr.mxu0 0.0
  %528 = vmatpush1.msra.mxu0 0.0
  %529 = vmatprep.subr.mxu0 0.0
  %530 = vmatpush1.msra.mxu0 0.0
  %531 = vmatprep.subr.mxu0 0.0
  %532 = vmatpush1.msra.mxu0 0.0
  %533 = vmatprep.subr.mxu0 0.0
  %534 = vmatpush1.msra.mxu0 0.0
  %535 = vmatprep.subr.mxu0 0.0
  %536 = vmatpush1.msra.mxu0 0.0
  %537 = vmatprep.subr.mxu0 0.0
  %538 = vmatpush1.msra.mxu0 0.0
  %539 = vmatprep.subr.mxu0 0.0
  %540 = vmatpush1.msra.mxu0 0.0
  %541 = vmatprep.subr.mxu0 0.0
  %542 = vmatpush1.msra.mxu0 0.0
  %543 = vmatprep.subr.mxu0 0.0
  %544 = vmatpush1.msra.mxu0 0.0
  %545 = vmatprep.subr.mxu0 0.0
  %546 = vmatpush1.msra.mxu0 0.0
  %547 = vmatprep.subr.mxu0 0.0
  %548 = vmatpush1.msra.mxu0 0.0
  %549 = vmatprep.subr.mxu0 0.0
  %550 = vmatpush1.msra.mxu0 0.0
  %551 = vmatprep.subr.mxu0 0.0
  %552 = vmatpush1.msra.mxu0 0.0
  %553 = vmatprep.subr.mxu0 0.0
  %554 = vmatpush1.msra.mxu0 0.0
  %555 = vmatprep.subr.mxu0 0.0
  %556 = vmatpush1.msra.mxu0 0.0
  %557 = vmatprep.subr.mxu0 0.0
  %558 = vmatpush1.msra.mxu0 0.0
  %559 = vmatprep.subr.mxu0 0.0
  %560 = vmatpush1.msra.mxu0 0.0
  %561 = vmatprep.subr.mxu0 0.0
  %562 = vmatpush1.msra.mxu0 0.0
  %563 = vmatprep.subr.mxu0 0.0
  %564 = vmatpush1.msra.mxu0 0.0
  %565 = vmatprep.subr.mxu0 0.0
  %566 = vmatpush1.msra.mxu0 0.0
  %567 = vmatprep.subr.mxu0 0.0
  %568 = vmatpush1.msra.mxu0 0.0
  %569 = vmatprep.subr.mxu0 0.0
  %570 = vmatpush1.msra.mxu0 0.0
  %571 = vmatprep.subr.mxu0 0.0
  %572 = vmatpush1.msra.mxu0 0.0
  %573 = vmatprep.subr.mxu0 0.0
  %574 = vmatpush1.msra.mxu0 0.0
  %575 = vmatprep.subr.mxu0 0.0
  %576 = vmatpush1.msra.mxu0 0.0
  %577 = vmatprep.mubr.f32.mxu0 0.0
  %578 = vmatmul.mubr.f32.gmra.mrb[0].mxu0 %v511
  %v579 = vpop.f32.mrb[0].mxu0
  %v580 = vadd.f32 0.0, %v579
  %v581 = vpop.f32.mrb[0].mxu0
  %582 = vdwg.mxu0
  %v583 = vlaneseq
  %v584 = vshrl.u32 %v583, 7
  %v585 = vsub.s32 0, %v584
  %v586 = vrot.slane %v31, %v585
  %v587 = vadd.f32 %v580, %v586
  %v588 = vtanh.pop %v587
  %vm589 = vcmp.gt.f32.partialorder %v17, 0.05
  %v590 = vand.u32 2147483647, %v174
  %vm591 = vcmp.gt.f32.partialorder %v590, 1e-06
  %v592 = vsel %vm591, 1, 0
  %593 = vrot.lane.b32.xlu0 %v592, 9
  %v594 = vpop.permute.xlu0 %593
  %vm595 = vcmp.ne.s32.totalorder %v594, 0
  %vm596 = vmand %vm589, %vm595
  %vm597 = vcmp.gt.f32.partialorder %v17, 0.5
  %vm598 = vcmp.lt.f32.partialorder %v17, 0.5
  %600 = vrot.lane.b32.xlu0 %v174, 8
  %v601 = vpop.permute.xlu0 %600
  %v603 = vsel %vm598, %v601, 0.0
  %604 = vrot.lane.b32.xlu0 %v174, 9
  %v605 = vpop.permute.xlu0 %604
  %v607 = vsel %vm597, %v605, %v603
  %609 = vrot.lane.b32.xlu0 %v607, 116
  %v610 = vpop.permute.xlu0 %609
  %v612 = vadd.f32 %v174, %v610
  %614 = vrot.lane.b32.xlu0 %v612, 11
  %v615 = vpop.permute.xlu0 %614
  %617 = vrot.lane.b32.xlu0 %v174, 11
  %v618 = vpop.permute.xlu0 %617
  %v620 = vsel %vm596, %v615, %v618
  %v621 = vmul.f32 %v588, 0.1
  %622 = vrot.lane.b32.xlu0 %v174, 127
  %v623 = vpop.permute.xlu0 %622
  %v625 = vadd.f32 %v621, %v623
  %vm626 = vcmp.lt.f32.partialorder %v17, 1e-06
  %628 = vrot.lane.b32.xlu0 %v620, 117
  %v629 = vpop.permute.xlu0 %628
  %v631 = vadd.f32 %v625, %v629
  %633 = vrot.lane.b32.xlu0 %v631, 12
  %v634 = vpop.permute.xlu0 %633
  %v636 = vsel %vm626, 0.0, %v634
  %638 = vrot.lane.b32.xlu0 %v407, 96
  %v639 = vpop.permute.xlu0 %638
  %642 = vrot.lane.b32.xlu0 %v284, 32
  %v643 = vpop.permute.xlu0 %642
  %646 = vrot.lane.b32.xlu0 %v401, 64
  %v647 = vpop.permute.xlu0 %646
  %v649 = vsel %vm188, %v306, %v639
  %vm650 = vcmask 523264
  %v651 = vsel %vm650, %v649, %v643
  %vm652 = vcmask 785408
  %v653 = vsel %vm652, %v651, %v647
  %654 = vst [vmem:[%s4] sm:$0xff] %v653
  %656 = vrot.lane.b32.xlu0 %v636, 116
  %v657 = vpop.permute.xlu0 %656
  %660 = vrot.lane.b32.xlu0 %v625, 1
  %v661 = vpop.permute.xlu0 %660
  %663 = vrot.lane.b32.xlu0 %v620, 119
  %v664 = vpop.permute.xlu0 %663
  %vm666 = vcmask 7168
  %v667 = vsel %vm666, %v657, %v661
  %vm668 = vcmask 15360
  %v669 = vsel %vm668, %v667, %v664
  %vm670 = vcmask 23552
  %v671 = vsel %vm670, %v669, 0.0
  %vm672 = vcmask 64512
  %673 = vst.msk [vmem:[%s4 + $0x8] sm:$0xff] %vm672, %v671
  // Predicated region
  $region18: #{pcnn_forward.1} parent=0 // pred_check
    _
  $region19: #{pcnn_forward.1} parent=0 // pred_check_branch
    %675 = sbr.rel (0) target = $region21
  $region20: #{pcnn_forward.1} parent=0 // pred_region
    _
  $region21: #{pcnn_forward.1} parent=0 // pred_fallthru
    _
  // Predicated region
  $region22: #{pcnn_forward.1} parent=0 // pred_check
    _
  $region23: #{pcnn_forward.1} parent=0 // pred_check_branch
    %677 = sbr.rel (0) target = $region25
  $region24: #{pcnn_forward.1} parent=0 // pred_region
    _
  $region25: #{pcnn_forward.1} parent=0 // pred_fallthru
    _

</llo_original>
